<compile_context>
chip_gen: v7x
topology: tpu7x:2x2x1
jax: 0.10.0
libtpu: 0.0.40
codegen_flags: <defaults>
</compile_context>

<pallas_src>
import jax
import jax.numpy as jnp
from jax import lax
from jax.experimental import pallas as pl
from jax.experimental.pallas import tpu as pltpu


def _linear_kernel(x_ref, w_ref, b_ref, o_ref):
    """y = x @ W.T + b computed in one shot (no grid).

    x_ref: (B, K) f32
    w_ref: (Npad, K) f32  (PyTorch Linear layout, class dim zero-padded to 128)
    b_ref: (1, Npad) f32
    o_ref: (B, Npad) f32
    """
    y = lax.dot_general(
        x_ref[...],
        w_ref[...],
        dimension_numbers=(((1,), (1,)), ((), ())),  # contract K with K
        preferred_element_type=jnp.float32,
    )
    # Bias add, then (identity) dropout — eval-mode Dropout2d is a no-op.
    # TODO(synk): training-mode Dropout2d masking (pltpu.prng_*) not
    # implemented; PyTorch RNG streams cannot be reproduced bit-exactly.
    o_ref[...] = (y + b_ref[...]).astype(o_ref.dtype)


@jax.jit
def iterated_loss_classifier_forward(src, weight, bias):
    """Forward pass: dropout(Linear(src)) with dropout in eval mode.

    Args:
      src:    (B, ...) float32 — flattened to (B, in_features).
      weight: (num_classes, in_features) float32 (PyTorch Linear layout).
      bias:   (num_classes,) float32.
    Returns:
      (B, num_classes) float32.
    """
    b = src.shape[0]
    x = src.reshape(b, -1)
    in_features = x.shape[1]
    num_classes = weight.shape[0]

    # Pad class dimension up to a multiple of 128 for lane-dense MXU output
    # and unmasked vector stores.
    n_pad = ((num_classes + 127) // 128) * 128
    pad_n = n_pad - num_classes
    w_pad = jnp.pad(weight, ((0, pad_n), (0, 0)))          # (Npad, K)
    b_pad = jnp.pad(bias, (0, pad_n)).reshape(1, n_pad)     # (1, Npad)

    out_pad = pl.pallas_call(
        _linear_kernel,
        out_shape=jax.ShapeDtypeStruct((b, n_pad), x.dtype),
        in_specs=[
            pl.BlockSpec(memory_space=pltpu.MemorySpace.VMEM),  # x
            pl.BlockSpec(memory_space=pltpu.MemorySpace.VMEM),  # weight
            pl.BlockSpec(memory_space=pltpu.MemorySpace.VMEM),  # bias
        ],
        out_specs=pl.BlockSpec(memory_space=pltpu.MemorySpace.VMEM),
        compiler_params=pltpu.CompilerParams(
            vmem_limit_bytes=32 * 1024 * 1024,
        ),
    )(x, w_pad, b_pad)

    return out_pad[:, :num_classes]


def init_params(key, encoding_shape, num_classes):
    """Deterministic PyTorch-style Linear init: U(-1/sqrt(fan_in), 1/sqrt(fan_in))."""
    in_features = 1
    for d in encoding_shape:
        in_features *= int(d)
    k_w, k_b = jax.random.split(key)
    bound = 1.0 / (in_features ** 0.5)
    weight = jax.random.uniform(
        k_w, (num_classes, in_features), jnp.float32, minval=-bound, maxval=bound
    )
    bias = jax.random.uniform(
        k_b, (num_classes,), jnp.float32, minval=-bound, maxval=bound
    )
    return weight, bias


if __name__ == "__main__":
    key = jax.random.PRNGKey(0)
    k_params, k_x = jax.random.split(key)

    batch = 2
    encoding_shape = (4, 16, 16)          # -> in_features = 1024
    num_classes = 10

    weight, bias = init_params(k_params, encoding_shape, num_classes)

    # src arrives with the encoding's spatial/channel dims; the wrapper
    # flattens to (B, in_features) exactly like the PyTorch Linear does.
    src = jax.random.normal(
        k_x, (batch,) + encoding_shape, dtype=jnp.float32
    )

    out = iterated_loss_classifier_forward(src, weight, bias)
    jax.block_until_ready(out)

    # Cross-check against plain-JAX reference.
    ref = src.reshape(batch, -1) @ weight.T + bias
    assert out.shape == (batch, num_classes)
    assert jnp.allclose(out, ref, atol=1e-5, rtol=1e-5)

    print("KERNEL_OK")
</pallas_src>

<mosaic_0001>
module attributes {stable_mosaic.version = 11 : i64} {
  func.func @_linear_kernel(%arg0: memref<2x1024xf32, #tpu.memory_space<vmem>>, %arg1: memref<128x1024xf32, #tpu.memory_space<vmem>>, %arg2: memref<1x128xf32, #tpu.memory_space<vmem>>, %arg3: memref<2x128xf32, #tpu.memory_space<vmem>>) attributes {dimension_semantics = [], scalar_prefetch = 0 : i64, scratch_operands = 0 : i64, tpu.core_type = #tpu.core_type<tc>} {
    %c0 = arith.constant 0 : index
    %c0_0 = arith.constant 0 : index
    %0 = vector.load %arg0[%c0, %c0_0] : memref<2x1024xf32, #tpu.memory_space<vmem>>, vector<2x1024xf32>
    %c0_1 = arith.constant 0 : index
    %c0_2 = arith.constant 0 : index
    %1 = vector.load %arg1[%c0_1, %c0_2] : memref<128x1024xf32, #tpu.memory_space<vmem>>, vector<128x1024xf32>
    %cst = arith.constant dense<0.000000e+00> : vector<2x128xf32>
    %2 = tpu.matmul %0, %1, %cst {dimension_numbers = #tpu.dot_dimension_numbers<[1], [1], [0], [0], [0, 0, 1, 0], [], []>} : vector<2x1024xf32>, vector<128x1024xf32>, vector<2x128xf32> -> vector<2x128xf32>
    %c0_3 = arith.constant 0 : index
    %c0_4 = arith.constant 0 : index
    %3 = vector.load %arg2[%c0_3, %c0_4] : memref<1x128xf32, #tpu.memory_space<vmem>>, vector<1x128xf32>
    %4 = vector.broadcast %3 : vector<1x128xf32> to vector<2x128xf32>
    %5 = arith.addf %2, %4 : vector<2x128xf32>
    %c0_5 = arith.constant 0 : index
    %c0_6 = arith.constant 0 : index
    %6 = vector.load %arg3[%c0_5, %c0_6] : memref<2x128xf32, #tpu.memory_space<vmem>>, vector<2x128xf32>
    tpu.vector_store %arg3[%c0_5, %c0_6], %5 {strides = array<i32>} : memref<2x128xf32, #tpu.memory_space<vmem>>, vector<2x128xf32>,
    return
  }
}

</mosaic_0001>

<llo_original>
// kernel: iterated_loss_classifier_forward.1
$region0: #{iterated_loss_classifier_forward.1}
  #allocation0 [shape = 'u32[]', space=smem, size = 0x4, offset = 0x4, fixed_abs, tag = 'smem constant byte address 0x4 - core index']
  #allocation1 [shape = 'u32[144,128]{1,0:T(1,128)}', space=vmem, size = 0x12000, scoped, tag = 'internal scratch']
  %s0 = inlined_call_operand.vmem [shape: f32[2,1024], index: 0, kind: input, shape index: {}]
  %s1 = inlined_call_operand.vmem [shape: f32[128,1024], index: 1, kind: input, shape index: {}]
  %s2 = inlined_call_operand.vmem [shape: f32[1,128], index: 2, kind: input, shape index: {}]
  %s3 = inlined_call_operand.hbm [shape: f32[2,128], index: 3, kind: output, shape index: {}]
  %s4 = sld [smem:[#allocation0]]
  $region22: #{iterated_loss_classifier_forward.1} parent=0
    _
  %s6 = ssub.s32 1, %s4
  %s7 = scalar_select 0, %s6, %s4
  $region1: #{iterated_loss_classifier_forward.1} parent=0
    #allocation2 [shape = 'u8[1024]{0}', space=vmem, size = 0x400, scoped, tag = 'output window, operand 0, single buffered']
    #allocation3 [shape = 's32[1]{0}', space=sflag, size = 0x4, scoped, tag = 'scoped memory for iterated_loss_classifier_forward.1']
    %8 = vsyncpa [#allocation3], 0
    // Predicated region
    $region2: #{iterated_loss_classifier_forward.1} parent=1 // pred_check
      _
    $region3: #{iterated_loss_classifier_forward.1} parent=1 // pred_check_branch
      %10 = sbr.rel (0) target = $region5
    $region4: #{iterated_loss_classifier_forward.1} parent=1 // pred_region
      _
    $region5: #{iterated_loss_classifier_forward.1} parent=1 // pred_fallthru
      _
    // Predicated region
    $region6: #{iterated_loss_classifier_forward.1} parent=1 // pred_check
      _
    $region7: #{iterated_loss_classifier_forward.1} parent=1 // pred_check_branch
      %12 = sbr.rel (0) target = $region9
    $region8: #{iterated_loss_classifier_forward.1} parent=1 // pred_region
      _
    $region9: #{iterated_loss_classifier_forward.1} parent=1 // pred_fallthru
      _
    // Predicated region
    $region10: #{iterated_loss_classifier_forward.1} parent=1 // pred_check
      _
    $region11: #{iterated_loss_classifier_forward.1} parent=1 // pred_check_branch
      %14 = sbr.rel (0) target = $region13
    $region12: #{iterated_loss_classifier_forward.1} parent=1 // pred_region
      _
    $region13: #{iterated_loss_classifier_forward.1} parent=1 // pred_fallthru
      _
    %v15 = vld [vmem:[%s0] sm:$0xff]
    %v16 = vld [vmem:[%s0 + $0x8] sm:$0xff]
    %v17 = vld [vmem:[%s1] sm:$0xff]
    %v18 = vld [vmem:[%s1 + $0x8] sm:$0xff]
    %v19 = vld [vmem:[%s1 + $0x10] sm:$0xff]
    %v20 = vld [vmem:[%s1 + $0x18] sm:$0xff]
    %v21 = vld [vmem:[%s1 + $0x20] sm:$0xff]
    %v22 = vld [vmem:[%s1 + $0x28] sm:$0xff]
    %v23 = vld [vmem:[%s1 + $0x30] sm:$0xff]
    %v24 = vld [vmem:[%s1 + $0x38] sm:$0xff]
    %v25 = vld [vmem:[%s1 + $0x40] sm:$0xff]
    %v26 = vld [vmem:[%s1 + $0x48] sm:$0xff]
    %v27 = vld [vmem:[%s1 + $0x50] sm:$0xff]
    %v28 = vld [vmem:[%s1 + $0x58] sm:$0xff]
    %v29 = vld [vmem:[%s1 + $0x60] sm:$0xff]
    %v30 = vld [vmem:[%s1 + $0x68] sm:$0xff]
    %v31 = vld [vmem:[%s1 + $0x70] sm:$0xff]
    %v32 = vld [vmem:[%s1 + $0x78] sm:$0xff]
    %v33 = vld [vmem:[%s1 + $0x80] sm:$0xff]
    %v34 = vld [vmem:[%s1 + $0x88] sm:$0xff]
    %v35 = vld [vmem:[%s1 + $0x90] sm:$0xff]
    %v36 = vld [vmem:[%s1 + $0x98] sm:$0xff]
    %v37 = vld [vmem:[%s1 + $0xa0] sm:$0xff]
    %v38 = vld [vmem:[%s1 + $0xa8] sm:$0xff]
    %v39 = vld [vmem:[%s1 + $0xb0] sm:$0xff]
    %v40 = vld [vmem:[%s1 + $0xb8] sm:$0xff]
    %v41 = vld [vmem:[%s1 + $0xc0] sm:$0xff]
    %v42 = vld [vmem:[%s1 + $0xc8] sm:$0xff]
    %v43 = vld [vmem:[%s1 + $0xd0] sm:$0xff]
    %v44 = vld [vmem:[%s1 + $0xd8] sm:$0xff]
    %v45 = vld [vmem:[%s1 + $0xe0] sm:$0xff]
    %v46 = vld [vmem:[%s1 + $0xe8] sm:$0xff]
    %v47 = vld [vmem:[%s1 + $0xf0] sm:$0xff]
    %v48 = vld [vmem:[%s1 + $0xf8] sm:$0xff]
    %v49 = vld [vmem:[%s1 + $0x100] sm:$0xff]
    %v50 = vld [vmem:[%s1 + $0x108] sm:$0xff]
    %v51 = vld [vmem:[%s1 + $0x110] sm:$0xff]
    %v52 = vld [vmem:[%s1 + $0x118] sm:$0xff]
    %v53 = vld [vmem:[%s1 + $0x120] sm:$0xff]
    %v54 = vld [vmem:[%s1 + $0x128] sm:$0xff]
    %v55 = vld [vmem:[%s1 + $0x130] sm:$0xff]
    %v56 = vld [vmem:[%s1 + $0x138] sm:$0xff]
    %v57 = vld [vmem:[%s1 + $0x140] sm:$0xff]
    %v58 = vld [vmem:[%s1 + $0x148] sm:$0xff]
    %v59 = vld [vmem:[%s1 + $0x150] sm:$0xff]
    %v60 = vld [vmem:[%s1 + $0x158] sm:$0xff]
    %v61 = vld [vmem:[%s1 + $0x160] sm:$0xff]
    %v62 = vld [vmem:[%s1 + $0x168] sm:$0xff]
    %v63 = vld [vmem:[%s1 + $0x170] sm:$0xff]
    %v64 = vld [vmem:[%s1 + $0x178] sm:$0xff]
    %v65 = vld [vmem:[%s1 + $0x180] sm:$0xff]
    %v66 = vld [vmem:[%s1 + $0x188] sm:$0xff]
    %v67 = vld [vmem:[%s1 + $0x190] sm:$0xff]
    %v68 = vld [vmem:[%s1 + $0x198] sm:$0xff]
    %v69 = vld [vmem:[%s1 + $0x1a0] sm:$0xff]
    %v70 = vld [vmem:[%s1 + $0x1a8] sm:$0xff]
    %v71 = vld [vmem:[%s1 + $0x1b0] sm:$0xff]
    %v72 = vld [vmem:[%s1 + $0x1b8] sm:$0xff]
    %v73 = vld [vmem:[%s1 + $0x1c0] sm:$0xff]
    %v74 = vld [vmem:[%s1 + $0x1c8] sm:$0xff]
    %v75 = vld [vmem:[%s1 + $0x1d0] sm:$0xff]
    %v76 = vld [vmem:[%s1 + $0x1d8] sm:$0xff]
    %v77 = vld [vmem:[%s1 + $0x1e0] sm:$0xff]
    %v78 = vld [vmem:[%s1 + $0x1e8] sm:$0xff]
    %v79 = vld [vmem:[%s1 + $0x1f0] sm:$0xff]
    %v80 = vld [vmem:[%s1 + $0x1f8] sm:$0xff]
    %v81 = vld [vmem:[%s1 + $0x200] sm:$0xff]
    %v82 = vld [vmem:[%s1 + $0x208] sm:$0xff]
    %v83 = vld [vmem:[%s1 + $0x210] sm:$0xff]
    %v84 = vld [vmem:[%s1 + $0x218] sm:$0xff]
    %v85 = vld [vmem:[%s1 + $0x220] sm:$0xff]
    %v86 = vld [vmem:[%s1 + $0x228] sm:$0xff]
    %v87 = vld [vmem:[%s1 + $0x230] sm:$0xff]
    %v88 = vld [vmem:[%s1 + $0x238] sm:$0xff]
    %v89 = vld [vmem:[%s1 + $0x240] sm:$0xff]
    %v90 = vld [vmem:[%s1 + $0x248] sm:$0xff]
    %v91 = vld [vmem:[%s1 + $0x250] sm:$0xff]
    %v92 = vld [vmem:[%s1 + $0x258] sm:$0xff]
    %v93 = vld [vmem:[%s1 + $0x260] sm:$0xff]
    %v94 = vld [vmem:[%s1 + $0x268] sm:$0xff]
    %v95 = vld [vmem:[%s1 + $0x270] sm:$0xff]
    %v96 = vld [vmem:[%s1 + $0x278] sm:$0xff]
    %v97 = vld [vmem:[%s1 + $0x280] sm:$0xff]
    %v98 = vld [vmem:[%s1 + $0x288] sm:$0xff]
    %v99 = vld [vmem:[%s1 + $0x290] sm:$0xff]
    %v100 = vld [vmem:[%s1 + $0x298] sm:$0xff]
    %v101 = vld [vmem:[%s1 + $0x2a0] sm:$0xff]
    %v102 = vld [vmem:[%s1 + $0x2a8] sm:$0xff]
    %v103 = vld [vmem:[%s1 + $0x2b0] sm:$0xff]
    %v104 = vld [vmem:[%s1 + $0x2b8] sm:$0xff]
    %v105 = vld [vmem:[%s1 + $0x2c0] sm:$0xff]
    %v106 = vld [vmem:[%s1 + $0x2c8] sm:$0xff]
    %v107 = vld [vmem:[%s1 + $0x2d0] sm:$0xff]
    %v108 = vld [vmem:[%s1 + $0x2d8] sm:$0xff]
    %v109 = vld [vmem:[%s1 + $0x2e0] sm:$0xff]
    %v110 = vld [vmem:[%s1 + $0x2e8] sm:$0xff]
    %v111 = vld [vmem:[%s1 + $0x2f0] sm:$0xff]
    %v112 = vld [vmem:[%s1 + $0x2f8] sm:$0xff]
    %v113 = vld [vmem:[%s1 + $0x300] sm:$0xff]
    %v114 = vld [vmem:[%s1 + $0x308] sm:$0xff]
    %v115 = vld [vmem:[%s1 + $0x310] sm:$0xff]
    %v116 = vld [vmem:[%s1 + $0x318] sm:$0xff]
    %v117 = vld [vmem:[%s1 + $0x320] sm:$0xff]
    %v118 = vld [vmem:[%s1 + $0x328] sm:$0xff]
    %v119 = vld [vmem:[%s1 + $0x330] sm:$0xff]
    %v120 = vld [vmem:[%s1 + $0x338] sm:$0xff]
    %v121 = vld [vmem:[%s1 + $0x340] sm:$0xff]
    %v122 = vld [vmem:[%s1 + $0x348] sm:$0xff]
    %v123 = vld [vmem:[%s1 + $0x350] sm:$0xff]
    %v124 = vld [vmem:[%s1 + $0x358] sm:$0xff]
    %v125 = vld [vmem:[%s1 + $0x360] sm:$0xff]
    %v126 = vld [vmem:[%s1 + $0x368] sm:$0xff]
    %v127 = vld [vmem:[%s1 + $0x370] sm:$0xff]
    %v128 = vld [vmem:[%s1 + $0x378] sm:$0xff]
    %v129 = vld [vmem:[%s1 + $0x380] sm:$0xff]
    %v130 = vld [vmem:[%s1 + $0x388] sm:$0xff]
    %v131 = vld [vmem:[%s1 + $0x390] sm:$0xff]
    %v132 = vld [vmem:[%s1 + $0x398] sm:$0xff]
    %v133 = vld [vmem:[%s1 + $0x3a0] sm:$0xff]
    %v134 = vld [vmem:[%s1 + $0x3a8] sm:$0xff]
    %v135 = vld [vmem:[%s1 + $0x3b0] sm:$0xff]
    %v136 = vld [vmem:[%s1 + $0x3b8] sm:$0xff]
    %v137 = vld [vmem:[%s1 + $0x3c0] sm:$0xff]
    %v138 = vld [vmem:[%s1 + $0x3c8] sm:$0xff]
    %v139 = vld [vmem:[%s1 + $0x3d0] sm:$0xff]
    %v140 = vld [vmem:[%s1 + $0x3d8] sm:$0xff]
    %v141 = vld [vmem:[%s1 + $0x3e0] sm:$0xff]
    %v142 = vld [vmem:[%s1 + $0x3e8] sm:$0xff]
    %v143 = vld [vmem:[%s1 + $0x3f0] sm:$0xff]
    %v144 = vld [vmem:[%s1 + $0x3f8] sm:$0xff]
    %v145 = vld [vmem:[%s2] sm:$0x1]
    %v147 = vlaneseq
    %v148 = vshrl.u32 %v147, 7
    %v149 = vsub.s32 0, %v148
    %v150 = vrot.slane %v145, %v149
    %v154 = vcombine.high %v15, %v15
    %v156 = vunpack.c.l.s4 1983009808
    %v157 = vunpack.c.0.s8 %v156
    %v158 = vlaneseq
    %v159 = vshrl.u32 %v158, 7
    %v160 = vsub.s32 %v157, %v159
    %v161 = vrot.slane %v15, %v160
    %v163 = vunpack.c.l.s4 1983009808
    %v164 = vunpack.c.0.s8 %v163
    %v165 = vlaneseq
    %v166 = vshrl.u32 %v165, 7
    %v167 = vsub.s32 %v164, %v166
    %v168 = vrot.slane %v154, %v167
    %v169 = vcombine.high %v161, %v161
    %v170 = vcombine.high %v168, %v168
    %v171 = vcombine.high %v16, %v16
    %v173 = vunpack.c.l.s4 1983009808
    %v174 = vunpack.c.0.s8 %v173
    %v175 = vlaneseq
    %v176 = vshrl.u32 %v175, 7
    %v177 = vsub.s32 %v174, %v176
    %v178 = vrot.slane %v16, %v177
    %v180 = vunpack.c.l.s4 1983009808
    %v181 = vunpack.c.0.s8 %v180
    %v182 = vlaneseq
    %v183 = vshrl.u32 %v182, 7
    %v184 = vsub.s32 %v181, %v183
    %v185 = vrot.slane %v171, %v184
    %v186 = vcombine.high %v178, %v178
    %v187 = vcombine.high %v185, %v185
    %196 = vmatprep.subr.mxu0 %v18
    %197 = vmatpush1.xpose.msra.mxu0 %v17
    %198 = vmatprep.subr.mxu0 %v26
    %199 = vmatpush1.xpose.msra.mxu0 %v25
    %200 = vmatprep.subr.mxu0 %v34
    %201 = vmatpush1.xpose.msra.mxu0 %v33
    %202 = vmatprep.subr.mxu0 %v42
    %203 = vmatpush1.xpose.msra.mxu0 %v41
    %204 = vmatprep.subr.mxu0 %v50
    %205 = vmatpush1.xpose.msra.mxu0 %v49
    %206 = vmatprep.subr.mxu0 %v58
    %207 = vmatpush1.xpose.msra.mxu0 %v57
    %208 = vmatprep.subr.mxu0 %v66
    %209 = vmatpush1.xpose.msra.mxu0 %v65
    %210 = vmatprep.subr.mxu0 %v74
    %211 = vmatpush1.xpose.msra.mxu0 %v73
    %212 = vmatprep.subr.mxu0 %v82
    %213 = vmatpush1.xpose.msra.mxu0 %v81
    %214 = vmatprep.subr.mxu0 %v90
    %215 = vmatpush1.xpose.msra.mxu0 %v89
    %216 = vmatprep.subr.mxu0 %v98
    %217 = vmatpush1.xpose.msra.mxu0 %v97
    %218 = vmatprep.subr.mxu0 %v106
    %219 = vmatpush1.xpose.msra.mxu0 %v105
    %220 = vmatprep.subr.mxu0 %v114
    %221 = vmatpush1.xpose.msra.mxu0 %v113
    %222 = vmatprep.subr.mxu0 %v122
    %223 = vmatpush1.xpose.msra.mxu0 %v121
    %224 = vmatprep.subr.mxu0 %v130
    %225 = vmatpush1.xpose.msra.mxu0 %v129
    %226 = vmatprep.subr.mxu0 %v138
    %227 = vmatpush1.xpose.msra.mxu0 %v137
    %228 = vmatprep.subr.mxu0 0.0
    %229 = vmatpush1.xpose.msra.mxu0 0.0
    %230 = vmatprep.subr.mxu0 0.0
    %231 = vmatpush1.xpose.msra.mxu0 0.0
    %232 = vmatprep.subr.mxu0 0.0
    %233 = vmatpush1.xpose.msra.mxu0 0.0
    %234 = vmatprep.subr.mxu0 0.0
    %235 = vmatpush1.xpose.msra.mxu0 0.0
    %236 = vmatprep.subr.mxu0 0.0
    %237 = vmatpush1.xpose.msra.mxu0 0.0
    %238 = vmatprep.subr.mxu0 0.0
    %239 = vmatpush1.xpose.msra.mxu0 0.0
    %240 = vmatprep.subr.mxu0 0.0
    %241 = vmatpush1.xpose.msra.mxu0 0.0
    %242 = vmatprep.subr.mxu0 0.0
    %243 = vmatpush1.xpose.msra.mxu0 0.0
    %244 = vmatprep.subr.mxu0 0.0
    %245 = vmatpush1.xpose.msra.mxu0 0.0
    %246 = vmatprep.subr.mxu0 0.0
    %247 = vmatpush1.xpose.msra.mxu0 0.0
    %248 = vmatprep.subr.mxu0 0.0
    %249 = vmatpush1.xpose.msra.mxu0 0.0
    %250 = vmatprep.subr.mxu0 0.0
    %251 = vmatpush1.xpose.msra.mxu0 0.0
    %252 = vmatprep.subr.mxu0 0.0
    %253 = vmatpush1.xpose.msra.mxu0 0.0
    %254 = vmatprep.subr.mxu0 0.0
    %255 = vmatpush1.xpose.msra.mxu0 0.0
    %256 = vmatprep.subr.mxu0 0.0
    %257 = vmatpush1.xpose.msra.mxu0 0.0
    %258 = vmatprep.subr.mxu0 0.0
    %259 = vmatpush1.xpose.msra.mxu0 0.0
    %260 = vmatprep.mubr.f32.mxu0 %v169
    %261 = vmatmul.mubr.f32.gmra.mrb[0].mxu0 %v161
    %v262 = vpop.f32.mrb[0].mxu0
    %v263 = vadd.f32 %v150, %v262
    %v264 = vpop.f32.mrb[0].mxu0
    %265 = vdwg.mxu0
    %266 = vmatprep.subr.mxu0 %v20
    %267 = vmatpush1.xpose.msra.mxu0 %v19
    %268 = vmatprep.subr.mxu0 %v28
    %269 = vmatpush1.xpose.msra.mxu0 %v27
    %270 = vmatprep.subr.mxu0 %v36
    %271 = vmatpush1.xpose.msra.mxu0 %v35
    %272 = vmatprep.subr.mxu0 %v44
    %273 = vmatpush1.xpose.msra.mxu0 %v43
    %274 = vmatprep.subr.mxu0 %v52
    %275 = vmatpush1.xpose.msra.mxu0 %v51
    %276 = vmatprep.subr.mxu0 %v60
    %277 = vmatpush1.xpose.msra.mxu0 %v59
    %278 = vmatprep.subr.mxu0 %v68
    %279 = vmatpush1.xpose.msra.mxu0 %v67
    %280 = vmatprep.subr.mxu0 %v76
    %281 = vmatpush1.xpose.msra.mxu0 %v75
    %282 = vmatprep.subr.mxu0 %v84
    %283 = vmatpush1.xpose.msra.mxu0 %v83
    %284 = vmatprep.subr.mxu0 %v92
    %285 = vmatpush1.xpose.msra.mxu0 %v91
    %286 = vmatprep.subr.mxu0 %v100
    %287 = vmatpush1.xpose.msra.mxu0 %v99
    %288 = vmatprep.subr.mxu0 %v108
    %289 = vmatpush1.xpose.msra.mxu0 %v107
    %290 = vmatprep.subr.mxu0 %v116
    %291 = vmatpush1.xpose.msra.mxu0 %v115
    %292 = vmatprep.subr.mxu0 %v124
    %293 = vmatpush1.xpose.msra.mxu0 %v123
    %294 = vmatprep.subr.mxu0 %v132
    %295 = vmatpush1.xpose.msra.mxu0 %v131
    %296 = vmatprep.subr.mxu0 %v140
    %297 = vmatpush1.xpose.msra.mxu0 %v139
    %298 = vmatprep.subr.mxu0 0.0
    %299 = vmatpush1.xpose.msra.mxu0 0.0
    %300 = vmatprep.subr.mxu0 0.0
    %301 = vmatpush1.xpose.msra.mxu0 0.0
    %302 = vmatprep.subr.mxu0 0.0
    %303 = vmatpush1.xpose.msra.mxu0 0.0
    %304 = vmatprep.subr.mxu0 0.0
    %305 = vmatpush1.xpose.msra.mxu0 0.0
    %306 = vmatprep.subr.mxu0 0.0
    %307 = vmatpush1.xpose.msra.mxu0 0.0
    %308 = vmatprep.subr.mxu0 0.0
    %309 = vmatpush1.xpose.msra.mxu0 0.0
    %310 = vmatprep.subr.mxu0 0.0
    %311 = vmatpush1.xpose.msra.mxu0 0.0
    %312 = vmatprep.subr.mxu0 0.0
    %313 = vmatpush1.xpose.msra.mxu0 0.0
    %314 = vmatprep.subr.mxu0 0.0
    %315 = vmatpush1.xpose.msra.mxu0 0.0
    %316 = vmatprep.subr.mxu0 0.0
    %317 = vmatpush1.xpose.msra.mxu0 0.0
    %318 = vmatprep.subr.mxu0 0.0
    %319 = vmatpush1.xpose.msra.mxu0 0.0
    %320 = vmatprep.subr.mxu0 0.0
    %321 = vmatpush1.xpose.msra.mxu0 0.0
    %322 = vmatprep.subr.mxu0 0.0
    %323 = vmatpush1.xpose.msra.mxu0 0.0
    %324 = vmatprep.subr.mxu0 0.0
    %325 = vmatpush1.xpose.msra.mxu0 0.0
    %326 = vmatprep.subr.mxu0 0.0
    %327 = vmatpush1.xpose.msra.mxu0 0.0
    %328 = vmatprep.subr.mxu0 0.0
    %329 = vmatpush1.xpose.msra.mxu0 0.0
    %330 = vmatprep.mubr.f32.mxu0 %v170
    %331 = vmatmul.mubr.f32.gmra.mrb[0].mxu0 %v168
    %v332 = vpop.f32.mrb[0].mxu0
    %v333 = vadd.f32 %v263, %v332
    %v334 = vpop.f32.mrb[0].mxu0
    %335 = vdwg.mxu0
    %336 = vmatprep.subr.mxu0 %v22
    %337 = vmatpush1.xpose.msra.mxu0 %v21
    %338 = vmatprep.subr.mxu0 %v30
    %339 = vmatpush1.xpose.msra.mxu0 %v29
    %340 = vmatprep.subr.mxu0 %v38
    %341 = vmatpush1.xpose.msra.mxu0 %v37
    %342 = vmatprep.subr.mxu0 %v46
    %343 = vmatpush1.xpose.msra.mxu0 %v45
    %344 = vmatprep.subr.mxu0 %v54
    %345 = vmatpush1.xpose.msra.mxu0 %v53
    %346 = vmatprep.subr.mxu0 %v62
    %347 = vmatpush1.xpose.msra.mxu0 %v61
    %348 = vmatprep.subr.mxu0 %v70
    %349 = vmatpush1.xpose.msra.mxu0 %v69
    %350 = vmatprep.subr.mxu0 %v78
    %351 = vmatpush1.xpose.msra.mxu0 %v77
    %352 = vmatprep.subr.mxu0 %v86
    %353 = vmatpush1.xpose.msra.mxu0 %v85
    %354 = vmatprep.subr.mxu0 %v94
    %355 = vmatpush1.xpose.msra.mxu0 %v93
    %356 = vmatprep.subr.mxu0 %v102
    %357 = vmatpush1.xpose.msra.mxu0 %v101
    %358 = vmatprep.subr.mxu0 %v110
    %359 = vmatpush1.xpose.msra.mxu0 %v109
    %360 = vmatprep.subr.mxu0 %v118
    %361 = vmatpush1.xpose.msra.mxu0 %v117
    %362 = vmatprep.subr.mxu0 %v126
    %363 = vmatpush1.xpose.msra.mxu0 %v125
    %364 = vmatprep.subr.mxu0 %v134
    %365 = vmatpush1.xpose.msra.mxu0 %v133
    %366 = vmatprep.subr.mxu0 %v142
    %367 = vmatpush1.xpose.msra.mxu0 %v141
    %368 = vmatprep.subr.mxu0 0.0
    %369 = vmatpush1.xpose.msra.mxu0 0.0
    %370 = vmatprep.subr.mxu0 0.0
    %371 = vmatpush1.xpose.msra.mxu0 0.0
    %372 = vmatprep.subr.mxu0 0.0
    %373 = vmatpush1.xpose.msra.mxu0 0.0
    %374 = vmatprep.subr.mxu0 0.0
    %375 = vmatpush1.xpose.msra.mxu0 0.0
    %376 = vmatprep.subr.mxu0 0.0
    %377 = vmatpush1.xpose.msra.mxu0 0.0
    %378 = vmatprep.subr.mxu0 0.0
    %379 = vmatpush1.xpose.msra.mxu0 0.0
    %380 = vmatprep.subr.mxu0 0.0
    %381 = vmatpush1.xpose.msra.mxu0 0.0
    %382 = vmatprep.subr.mxu0 0.0
    %383 = vmatpush1.xpose.msra.mxu0 0.0
    %384 = vmatprep.subr.mxu0 0.0
    %385 = vmatpush1.xpose.msra.mxu0 0.0
    %386 = vmatprep.subr.mxu0 0.0
    %387 = vmatpush1.xpose.msra.mxu0 0.0
    %388 = vmatprep.subr.mxu0 0.0
    %389 = vmatpush1.xpose.msra.mxu0 0.0
    %390 = vmatprep.subr.mxu0 0.0
    %391 = vmatpush1.xpose.msra.mxu0 0.0
    %392 = vmatprep.subr.mxu0 0.0
    %393 = vmatpush1.xpose.msra.mxu0 0.0
    %394 = vmatprep.subr.mxu0 0.0
    %395 = vmatpush1.xpose.msra.mxu0 0.0
    %396 = vmatprep.subr.mxu0 0.0
    %397 = vmatpush1.xpose.msra.mxu0 0.0
    %398 = vmatprep.subr.mxu0 0.0
    %399 = vmatpush1.xpose.msra.mxu0 0.0
    %400 = vmatprep.mubr.f32.mxu0 %v186
    %401 = vmatmul.mubr.f32.gmra.mrb[0].mxu0 %v178
    %v402 = vpop.f32.mrb[0].mxu0
    %v403 = vadd.f32 %v333, %v402
    %v404 = vpop.f32.mrb[0].mxu0
    %405 = vdwg.mxu0
    %406 = vmatprep.subr.mxu0 %v24
    %407 = vmatpush1.xpose.msra.mxu0 %v23
    %408 = vmatprep.subr.mxu0 %v32
    %409 = vmatpush1.xpose.msra.mxu0 %v31
    %410 = vmatprep.subr.mxu0 %v40
    %411 = vmatpush1.xpose.msra.mxu0 %v39
    %412 = vmatprep.subr.mxu0 %v48
    %413 = vmatpush1.xpose.msra.mxu0 %v47
    %414 = vmatprep.subr.mxu0 %v56
    %415 = vmatpush1.xpose.msra.mxu0 %v55
    %416 = vmatprep.subr.mxu0 %v64
    %417 = vmatpush1.xpose.msra.mxu0 %v63
    %418 = vmatprep.subr.mxu0 %v72
    %419 = vmatpush1.xpose.msra.mxu0 %v71
    %420 = vmatprep.subr.mxu0 %v80
    %421 = vmatpush1.xpose.msra.mxu0 %v79
    %422 = vmatprep.subr.mxu0 %v88
    %423 = vmatpush1.xpose.msra.mxu0 %v87
    %424 = vmatprep.subr.mxu0 %v96
    %425 = vmatpush1.xpose.msra.mxu0 %v95
    %426 = vmatprep.subr.mxu0 %v104
    %427 = vmatpush1.xpose.msra.mxu0 %v103
    %428 = vmatprep.subr.mxu0 %v112
    %429 = vmatpush1.xpose.msra.mxu0 %v111
    %430 = vmatprep.subr.mxu0 %v120
    %431 = vmatpush1.xpose.msra.mxu0 %v119
    %432 = vmatprep.subr.mxu0 %v128
    %433 = vmatpush1.xpose.msra.mxu0 %v127
    %434 = vmatprep.subr.mxu0 %v136
    %435 = vmatpush1.xpose.msra.mxu0 %v135
    %436 = vmatprep.subr.mxu0 %v144
    %437 = vmatpush1.xpose.msra.mxu0 %v143
    %438 = vmatprep.subr.mxu0 0.0
    %439 = vmatpush1.xpose.msra.mxu0 0.0
    %440 = vmatprep.subr.mxu0 0.0
    %441 = vmatpush1.xpose.msra.mxu0 0.0
    %442 = vmatprep.subr.mxu0 0.0
    %443 = vmatpush1.xpose.msra.mxu0 0.0
    %444 = vmatprep.subr.mxu0 0.0
    %445 = vmatpush1.xpose.msra.mxu0 0.0
    %446 = vmatprep.subr.mxu0 0.0
    %447 = vmatpush1.xpose.msra.mxu0 0.0
    %448 = vmatprep.subr.mxu0 0.0
    %449 = vmatpush1.xpose.msra.mxu0 0.0
    %450 = vmatprep.subr.mxu0 0.0
    %451 = vmatpush1.xpose.msra.mxu0 0.0
    %452 = vmatprep.subr.mxu0 0.0
    %453 = vmatpush1.xpose.msra.mxu0 0.0
    %454 = vmatprep.subr.mxu0 0.0
    %455 = vmatpush1.xpose.msra.mxu0 0.0
    %456 = vmatprep.subr.mxu0 0.0
    %457 = vmatpush1.xpose.msra.mxu0 0.0
    %458 = vmatprep.subr.mxu0 0.0
    %459 = vmatpush1.xpose.msra.mxu0 0.0
    %460 = vmatprep.subr.mxu0 0.0
    %461 = vmatpush1.xpose.msra.mxu0 0.0
    %462 = vmatprep.subr.mxu0 0.0
    %463 = vmatpush1.xpose.msra.mxu0 0.0
    %464 = vmatprep.subr.mxu0 0.0
    %465 = vmatpush1.xpose.msra.mxu0 0.0
    %466 = vmatprep.subr.mxu0 0.0
    %467 = vmatpush1.xpose.msra.mxu0 0.0
    %468 = vmatprep.subr.mxu0 0.0
    %469 = vmatpush1.xpose.msra.mxu0 0.0
    %470 = vmatprep.mubr.f32.mxu0 %v187
    %471 = vmatmul.mubr.f32.gmra.mrb[0].mxu0 %v185
    %v472 = vpop.f32.mrb[0].mxu0
    %v473 = vadd.f32 %v403, %v472
    %v474 = vpop.f32.mrb[0].mxu0
    %475 = vdwg.mxu0
    %476 = vst [vmem:[#allocation2] sm:$0x3] %v473
    // Predicated region
    $region14: #{iterated_loss_classifier_forward.1} parent=1 // pred_check
      _
    $region15: #{iterated_loss_classifier_forward.1} parent=1 // pred_check_branch
      %478 = sbr.rel (0) target = $region17
    $region16: #{iterated_loss_classifier_forward.1} parent=1 // pred_region
      %s480 = ssub.s32 32, 32
      %481 = vsyncadd [#allocation3], %s480
      %s483 = sshll.u32 [#allocation2], 4
      %s484 = int_to_ptr.vmem [resolvable:$true] %s483
      %486 = dma.vmem_to_hbm [thread:$0]  %s484, 32, %s3, [#allocation3]
    $region17: #{iterated_loss_classifier_forward.1} parent=1 // pred_fallthru
      _
    // Predicated region
    $region18: #{iterated_loss_classifier_forward.1} parent=1 // pred_check
      _
    $region19: #{iterated_loss_classifier_forward.1} parent=1 // pred_check_branch
      %488 = sbr.rel (0) target = $region21
    $region20: #{iterated_loss_classifier_forward.1} parent=1 // pred_region
      %489 = dma.done [#allocation3], 32
    $region21: #{iterated_loss_classifier_forward.1} parent=1 // pred_fallthru
      _
    %490 = vsyncpa [#allocation3], 1

</llo_original>
